<compile_context>
chip_gen: v6e
topology: v6e:2x2x1
jax: 0.10.0
libtpu: 0.0.40
codegen_flags: <defaults>
</compile_context>

<pallas_src>
import functools

import jax
import jax.numpy as jnp
from jax.experimental import pallas as pl
from jax.experimental.pallas import tpu as pltpu

EPS = 1e-5
LEAKY_SLOPE = 0.2

_VMEM_LIMIT_CACHE = None


def _vmem_limit_bytes():
    """Generation-dependent scoped-VMEM limit (3/4 of physical capacity)."""
    global _VMEM_LIMIT_CACHE
    if _VMEM_LIMIT_CACHE is None:
        cap = 128 << 20
        try:
            info = pltpu.get_tpu_info()
            cap = int(getattr(info, "vmem_capacity_bytes", cap))
        except Exception:
            pass
        _VMEM_LIMIT_CACHE = max(32 << 20, (cap * 3) // 4)
    return _VMEM_LIMIT_CACHE


# --------------------------------------------------------------------------
# In-kernel helpers
# --------------------------------------------------------------------------
def _leaky(x):
    return jnp.where(x >= 0.0, x, LEAKY_SLOPE * x)


def _conv_taps(v_g, w, b, *, P, G, Wp):
    """3x3 / stride-1 / pad-1 conv evaluated on the padded grid via lane shifts.

    v_g : (Cin, P + 2G) f32 guarded input (guard + padded border are zero)
    w   : (Cout, 9*Cin) bf16, column k = (kh*3 + kw)*Cin + c
    b   : (Cout, 1) f32 or None
    Returns (Cout, P) f32.  Values at padded-grid border positions are garbage
    and must be masked by the caller.
    """
    cin = v_g.shape[0]
    cout = w.shape[0]
    slices = []
    for kh in range(3):
        for kw in range(3):
            a = G + (kh - 1) * Wp + (kw - 1)         # pure lane-shift slice
            slices.append(v_g[:, a:a + P])
    if cin % 8 == 0:
        # fused im2col panel -> one MXU matmul with K = 9*Cin
        panel = jnp.concatenate(slices, axis=0).astype(jnp.bfloat16)     # (9*Cin, P)
        acc = jnp.dot(w, panel, preferred_element_type=jnp.float32)
    else:
        # per-tap fallback for sublane-misaligned channel counts
        acc = jnp.zeros((cout, P), jnp.float32)
        for t, s in enumerate(slices):
            acc = acc + jnp.dot(w[:, t * cin:(t + 1) * cin],
                                s.astype(jnp.bfloat16),
                                preferred_element_type=jnp.float32)
    if b is not None:
        acc = acc + b
    return acc


# --------------------------------------------------------------------------
# Pallas kernels
# --------------------------------------------------------------------------
def _bn_stats_kernel(x_ref, mean_ref, rstd_ref, sum_ref, sq_ref, *, count):
    """Per-channel batch-norm stats over (N, H, W); guards/borders are zero."""
    n = pl.program_id(0)

    @pl.when(n == 0)
    def _():
        sum_ref[...] = jnp.zeros_like(sum_ref)
        sq_ref[...] = jnp.zeros_like(sq_ref)
        mean_ref[...] = jnp.zeros_like(mean_ref)
        rstd_ref[...] = jnp.zeros_like(rstd_ref)

    x = x_ref[0]                                           # (C, Pg) f32
    sum_ref[...] += jnp.sum(x, axis=1, keepdims=True)
    sq_ref[...] += jnp.sum(x * x, axis=1, keepdims=True)

    @pl.when(n == pl.num_programs(0) - 1)
    def _():
        mean = sum_ref[...] * (1.0 / count)
        var = sq_ref[...] * (1.0 / count) - mean * mean    # biased variance
        mean_ref[...] = mean
        rstd_ref[...] = jax.lax.rsqrt(jnp.maximum(var, 0.0) + EPS)


def _front_kernel(*refs, in_c, mid_c, out_c, hid, H, W, has_cut, count):
    """spade_0 + LeakyReLU + conv_0 (+ spade_cut + conv_cut) fused per image.

    Also accumulates z0's BN statistics across the (sequential) grid so z0 is
    never re-read from HBM just to compute them.
    """
    Wp = W + 2
    P = (H + 2) * Wp
    G = Wp + 1

    if has_cut:
        (seg_ref, x_ref, mx_ref, rx_ref, mask_ref,
         wsh_ref, bsh_ref, wsb0_ref, bsb0_ref, wc0_ref, bc0_ref,
         wsbc_ref, bsbc_ref, wcc_ref,
         z0_ref, mz_ref, rz_ref, xs_ref,
         sum_ref, sq_ref, hg_ref, yg_ref) = refs
    else:
        (seg_ref, x_ref, mx_ref, rx_ref, mask_ref,
         wsh_ref, bsh_ref, wsb0_ref, bsb0_ref, wc0_ref, bc0_ref,
         z0_ref, mz_ref, rz_ref,
         sum_ref, sq_ref, hg_ref, yg_ref) = refs

    n = pl.program_id(0)

    @pl.when(n == 0)
    def _():
        # zero the guarded scratch once: guards stay zero across grid steps,
        # interiors are fully overwritten every step (grid axis is arbitrary,
        # i.e. sequential on one core, so this covers every step).
        hg_ref[...] = jnp.zeros_like(hg_ref)
        yg_ref[...] = jnp.zeros_like(yg_ref)
        sum_ref[...] = jnp.zeros_like(sum_ref)
        sq_ref[...] = jnp.zeros_like(sq_ref)
        mz_ref[...] = jnp.zeros_like(mz_ref)
        rz_ref[...] = jnp.zeros_like(rz_ref)

    mask = mask_ref[...]                                   # (1, P)
    seg = seg_ref[0]                                       # (seg_c_pad, Pg) f32
    x = x_ref[0]                                           # (in_c, Pg) f32

    # ---- shared conv(s): seg -> hid (and hid for the cut branch), ReLU ----
    h_all = _conv_taps(seg, wsh_ref[...], bsh_ref[...], P=P, G=G, Wp=Wp)
    h_all = jnp.maximum(h_all, 0.0) * mask                 # masked border == zero-pad
    hg_ref[:, G:G + P] = h_all
    h_g = hg_ref[...]                                      # (hid_tot, Pg)

    # ---- BN normalize of x (shared by spade_0 and spade_cut) ----
    norm = (x[:, G:G + P] - mx_ref[...]) * rx_ref[...]     # (in_c, P)

    # ---- spade_0: fused scale||bias conv, modulate, LeakyReLU; then conv_0 ----
    sb0 = _conv_taps(h_g[:hid], wsb0_ref[...], bsb0_ref[...], P=P, G=G, Wp=Wp)
    y0 = _leaky(norm * (1.0 + sb0[:in_c]) + sb0[in_c:]) * mask
    yg_ref[:, G:G + P] = y0
    z0 = _conv_taps(yg_ref[...], wc0_ref[...], bc0_ref[...], P=P, G=G, Wp=Wp) * mask

    zdt = z0_ref.dtype
    z0_ref[0, :, 0:G] = jnp.zeros((mid_c, G), zdt)
    z0_ref[0, :, G + P:] = jnp.zeros((mid_c, G), zdt)
    z0_ref[0, :, G:G + P] = z0.astype(zdt)

    # ---- z0 BN statistics fused into the conv_0 epilogue ----
    sum_ref[...] += jnp.sum(z0, axis=1, keepdims=True)
    sq_ref[...] += jnp.sum(z0 * z0, axis=1, keepdims=True)

    @pl.when(n == pl.num_programs(0) - 1)
    def _():
        mean = sum_ref[...] * (1.0 / count)
        var = sq_ref[...] * (1.0 / count) - mean * mean
        mz_ref[...] = mean
        rz_ref[...] = jax.lax.rsqrt(jnp.maximum(var, 0.0) + EPS)

    if has_cut:
        # ---- spade_cut (no LeakyReLU) + conv_cut, reusing seg/h/norm ----
        sbc = _conv_taps(h_g[hid:], wsbc_ref[...], bsbc_ref[...], P=P, G=G, Wp=Wp)
        yc = (norm * (1.0 + sbc[:in_c]) + sbc[in_c:]) * mask
        yg_ref[:, G:G + P] = yc
        xs = _conv_taps(yg_ref[...], wcc_ref[...], None, P=P, G=G, Wp=Wp) * mask
        xdt = xs_ref.dtype
        xs_ref[0, :, 0:G] = jnp.zeros((out_c, G), xdt)
        xs_ref[0, :, G + P:] = jnp.zeros((out_c, G), xdt)
        xs_ref[0, :, G:G + P] = xs.astype(xdt)


def _back_kernel(seg_ref, z_ref, xs_ref, mz_ref, rz_ref, mask_ref,
                 wsh_ref, bsh_ref, wsb_ref, bsb_ref, wc1_ref, bc1_ref,
                 out_ref, hg_ref, yg_ref, *, mid_c, out_c, hid, H, W):
    """spade_1 + LeakyReLU + conv_1 + residual add fused per image."""
    Wp = W + 2
    P = (H + 2) * Wp
    G = Wp + 1

    # Grid axis is "parallel" (each core owns a disjoint set of steps), so the
    # thin guard strips are re-zeroed every step instead of once at step 0.
    hg_ref[:, 0:G] = jnp.zeros((hid, G), jnp.float32)
    hg_ref[:, G + P:] = jnp.zeros((hid, G), jnp.float32)
    yg_ref[:, 0:G] = jnp.zeros((mid_c, G), jnp.float32)
    yg_ref[:, G + P:] = jnp.zeros((mid_c, G), jnp.float32)

    mask = mask_ref[...]
    seg = seg_ref[0]                                       # (seg_c_pad, Pg)
    z = z_ref[0].astype(jnp.float32)                       # (mid_c, Pg)
    xs = xs_ref[0].astype(jnp.float32)                     # (out_c, Pg)

    h = _conv_taps(seg, wsh_ref[...], bsh_ref[...], P=P, G=G, Wp=Wp)
    h = jnp.maximum(h, 0.0) * mask
    hg_ref[:, G:G + P] = h

    norm = (z[:, G:G + P] - mz_ref[...]) * rz_ref[...]     # (mid_c, P)
    sb = _conv_taps(hg_ref[...], wsb_ref[...], bsb_ref[...], P=P, G=G, Wp=Wp)
    y1 = _leaky(norm * (1.0 + sb[:mid_c]) + sb[mid_c:]) * mask
    yg_ref[:, G:G + P] = y1

    res = _conv_taps(yg_ref[...], wc1_ref[...], bc1_ref[...], P=P, G=G, Wp=Wp)
    out = (res + xs[:, G:G + P]) * mask                    # fused residual add

    odt = out_ref.dtype
    out_ref[0, :, 0:G] = jnp.zeros((out_c, G), odt)
    out_ref[0, :, G + P:] = jnp.zeros((out_c, G), odt)
    out_ref[0, :, G:G + P] = out.astype(odt)


# --------------------------------------------------------------------------
# pallas_call wrappers
# --------------------------------------------------------------------------
def _bn_stats(x_g, count):
    N, C, Pg = x_g.shape
    mean, rstd = pl.pallas_call(
        functools.partial(_bn_stats_kernel, count=float(count)),
        grid=(N,),
        in_specs=[pl.BlockSpec((1, C, Pg), lambda n: (n, 0, 0))],
        out_specs=[pl.BlockSpec((C, 1), lambda n: (0, 0)),
                   pl.BlockSpec((C, 1), lambda n: (0, 0))],
        out_shape=[jax.ShapeDtypeStruct((C, 1), jnp.float32),
                   jax.ShapeDtypeStruct((C, 1), jnp.float32)],
        scratch_shapes=[pltpu.VMEM((C, 1), jnp.float32),
                        pltpu.VMEM((C, 1), jnp.float32)],
        compiler_params=pltpu.CompilerParams(
            dimension_semantics=("arbitrary",),
            vmem_limit_bytes=_vmem_limit_bytes()),
    )(x_g)
    return mean, rstd


def _spade_front(x_g, seg_g, mean_x, rstd_x, mask, params, *, H, W):
    N, in_c, Pg = x_g.shape
    seg_cp = seg_g.shape[1]
    hid = params["hid"]
    mid_c = params["mid_c"]
    out_c = params["out_c"]
    has_cut = params["is_shortcut"]
    hid_tot = 2 * hid if has_cut else hid

    def blk(c):
        return pl.BlockSpec((1, c, Pg), lambda n: (n, 0, 0))

    def res(a):
        return pl.BlockSpec(a.shape, lambda n: (0, 0))

    inputs = [seg_g, x_g, mean_x, rstd_x, mask,
              params["front_sh_w"], params["front_sh_b"],
              params["sb0_w"], params["sb0_b"],
              params["conv_0_w"], params["conv_0_b"]]
    in_specs = [blk(seg_cp), blk(in_c), res(mean_x), res(rstd_x), res(mask),
                res(params["front_sh_w"]), res(params["front_sh_b"]),
                res(params["sb0_w"]), res(params["sb0_b"]),
                res(params["conv_0_w"]), res(params["conv_0_b"])]
    out_shape = [jax.ShapeDtypeStruct((N, mid_c, Pg), jnp.bfloat16),
                 jax.ShapeDtypeStruct((mid_c, 1), jnp.float32),
                 jax.ShapeDtypeStruct((mid_c, 1), jnp.float32)]
    out_specs = [blk(mid_c),
                 pl.BlockSpec((mid_c, 1), lambda n: (0, 0)),
                 pl.BlockSpec((mid_c, 1), lambda n: (0, 0))]
    if has_cut:
        inputs += [params["sbc_w"], params["sbc_b"], params["conv_cut_w"]]
        in_specs += [res(params["sbc_w"]), res(params["sbc_b"]),
                     res(params["conv_cut_w"])]
        out_shape.append(jax.ShapeDtypeStruct((N, out_c, Pg), jnp.bfloat16))
        out_specs.append(blk(out_c))

    scratch = [pltpu.VMEM((mid_c, 1), jnp.float32),
               pltpu.VMEM((mid_c, 1), jnp.float32),
               pltpu.VMEM((hid_tot, Pg), jnp.float32),
               pltpu.VMEM((in_c, Pg), jnp.float32)]

    outs = pl.pallas_call(
        functools.partial(_front_kernel, in_c=in_c, mid_c=mid_c, out_c=out_c,
                          hid=hid, H=H, W=W, has_cut=has_cut,
                          count=float(N * H * W)),
        grid=(N,),
        in_specs=in_specs,
        out_specs=out_specs,
        out_shape=out_shape,
        scratch_shapes=scratch,
        compiler_params=pltpu.CompilerParams(
            dimension_semantics=("arbitrary",),    # z0 stats accumulate over N
            vmem_limit_bytes=_vmem_limit_bytes()),
    )(*inputs)
    if has_cut:
        z0_g, mean_z, rstd_z, xs_g = outs
        return z0_g, mean_z, rstd_z, xs_g
    z0_g, mean_z, rstd_z = outs
    return z0_g, mean_z, rstd_z, None


def _spade_back(seg_g, z0_g, xs_g, mean_z, rstd_z, mask, params, *, H, W):
    N, mid_c, Pg = z0_g.shape
    out_c = params["out_c"]
    hid = params["hid"]
    seg_cp = seg_g.shape[1]

    def blk(c):
        return pl.BlockSpec((1, c, Pg), lambda n: (n, 0, 0))

    def res(a):
        return pl.BlockSpec(a.shape, lambda n: (0, 0))

    inputs = [seg_g, z0_g, xs_g, mean_z, rstd_z, mask,
              params["sh1_w"], params["sh1_b"],
              params["sb1_w"], params["sb1_b"],
              params["conv_1_w"], params["conv_1_b"]]
    in_specs = [blk(seg_cp), blk(mid_c), blk(xs_g.shape[1]),
                res(mean_z), res(rstd_z), res(mask),
                res(params["sh1_w"]), res(params["sh1_b"]),
                res(params["sb1_w"]), res(params["sb1_b"]),
                res(params["conv_1_w"]), res(params["conv_1_b"])]

    return pl.pallas_call(
        functools.partial(_back_kernel, mid_c=mid_c, out_c=out_c, hid=hid,
                          H=H, W=W),
        grid=(N,),
        in_specs=in_specs,
        out_specs=blk(out_c),
        out_shape=jax.ShapeDtypeStruct((N, out_c, Pg), jnp.float32),
        scratch_shapes=[pltpu.VMEM((hid, Pg), jnp.float32),
                        pltpu.VMEM((mid_c, Pg), jnp.float32)],
        compiler_params=pltpu.CompilerParams(
            dimension_semantics=("parallel",),
            vmem_limit_bytes=_vmem_limit_bytes()),
    )(*inputs)


# --------------------------------------------------------------------------
# Host-side glue (layout prep, executed once per block)
# --------------------------------------------------------------------------
def _nearest_resize_nchw(seg, out_hw):
    # PyTorch F.interpolate(mode='nearest'): src = floor(dst * in / out)
    N, C, h, w = seg.shape
    H, W = out_hw
    ry = (jnp.arange(H) * h) // H
    rx = (jnp.arange(W) * w) // W
    return seg[:, :, ry, :][:, :, :, rx]


def _pad_channels(a, c_to):
    c = a.shape[1]
    if c == c_to:
        return a
    return jnp.pad(a, ((0, 0), (0, c_to - c), (0, 0), (0, 0)))


def _to_guarded_flat(a):
    """(N, C, H, W) -> (N, C, Pg): zero conv border + zero lane guards of W+3."""
    N, C, H, W = a.shape
    Wp = W + 2
    G = Wp + 1
    ap = jnp.pad(a.astype(jnp.float32), ((0, 0), (0, 0), (1, 1), (1, 1)))
    flat = ap.reshape(N, C, (H + 2) * Wp)
    return jnp.pad(flat, ((0, 0), (0, 0), (G, G)))


def _border_mask(H, W):
    Hp, Wp = H + 2, W + 2
    yy = jnp.arange(Hp)
    xx = jnp.arange(Wp)
    m = ((yy >= 1) & (yy <= H))[:, None] & ((xx >= 1) & (xx <= W))[None, :]
    return m.reshape(1, Hp * Wp).astype(jnp.float32)


# --------------------------------------------------------------------------
# SPADEResBlk forward (public, PyTorch NCHW in / NCHW out, no transposes)
# --------------------------------------------------------------------------
def spade_resblk(x_nchw, seg_nchw, params):
    N, in_c, H, W = x_nchw.shape
    out_c = params["out_c"]
    Hp, Wp = H + 2, W + 2
    P = Hp * Wp
    G = Wp + 1

    x_g = _to_guarded_flat(x_nchw)
    seg_r = _pad_channels(_nearest_resize_nchw(seg_nchw, (H, W)),
                          params["seg_c_pad"])
    seg_g = _to_guarded_flat(seg_r)                       # reused by all 3 SPADEs
    mask = _border_mask(H, W)

    mean_x, rstd_x = _bn_stats(x_g, N * H * W)            # shared by spade_0/spade_cut
    z0_g, mean_z, rstd_z, xs_g = _spade_front(
        x_g, seg_g, mean_x, rstd_x, mask, params, H=H, W=W)
    if xs_g is None:                                      # no shortcut: residual is x
        xs_g = x_g
    out_g = _spade_back(seg_g, z0_g, xs_g, mean_z, rstd_z, mask, params,
                        H=H, W=W)

    out = out_g[:, :, G:G + P].reshape(N, out_c, Hp, Wp)[:, :, 1:1 + H, 1:1 + W]
    return out


# --------------------------------------------------------------------------
# Deterministic parameter init (shapes from SPADEResBlk.__init__)
# --------------------------------------------------------------------------
def _conv_pt(key, cin, cout, bias=True, scale=0.05):
    kw, kb = jax.random.split(key)
    w = jax.random.normal(kw, (cout, cin, 3, 3), jnp.float32) * scale
    b = jax.random.normal(kb, (cout,), jnp.float32) * scale if bias else None
    return w, b


def _flatten_w(w, cin_pad=None):
    # torch (Cout, Cin, 3, 3) -> (Cout, 9*Cin) bf16, column k = (kh*3+kw)*Cin + c
    cout, cin = w.shape[:2]
    if cin_pad is not None and cin_pad != cin:
        w = jnp.pad(w, ((0, 0), (0, cin_pad - cin), (0, 0), (0, 0)))
        cin = cin_pad
    return jnp.transpose(w, (0, 2, 3, 1)).reshape(cout, 9 * cin).astype(jnp.bfloat16)


def _bias_col(b, cout):
    if b is None:
        b = jnp.zeros((cout,), jnp.float32)
    return b.reshape(cout, 1).astype(jnp.float32)


def init_params(key, in_c, out_c, seg_c, hid):
    mid_c = min(in_c, out_c)
    is_shortcut = in_c != out_c
    seg_c_pad = ((seg_c + 7) // 8) * 8
    ks = jax.random.split(key, 12)

    sh0_w, sh0_b = _conv_pt(ks[0], seg_c, hid)            # spade_0.shared
    sc0_w, sc0_b = _conv_pt(ks[1], hid, in_c)             # spade_0.scale
    bi0_w, bi0_b = _conv_pt(ks[2], hid, in_c)             # spade_0.bias
    c0_w, c0_b = _conv_pt(ks[3], in_c, mid_c)             # conv_0
    sh1_w, sh1_b = _conv_pt(ks[4], seg_c, hid)            # spade_1.shared
    sc1_w, sc1_b = _conv_pt(ks[5], hid, mid_c)
    bi1_w, bi1_b = _conv_pt(ks[6], hid, mid_c)
    c1_w, c1_b = _conv_pt(ks[7], mid_c, out_c)            # conv_1

    params = {
        "in_c": in_c, "out_c": out_c, "mid_c": mid_c, "hid": hid,
        "seg_c": seg_c, "seg_c_pad": seg_c_pad, "is_shortcut": is_shortcut,
        # back kernel (spade_1 + conv_1)
        "sh1_w": _flatten_w(sh1_w, seg_c_pad), "sh1_b": _bias_col(sh1_b, hid),
        "sb1_w": jnp.concatenate([_flatten_w(sc1_w), _flatten_w(bi1_w)], axis=0),
        "sb1_b": jnp.concatenate([_bias_col(sc1_b, mid_c),
                                  _bias_col(bi1_b, mid_c)], axis=0),
        "conv_1_w": _flatten_w(c1_w), "conv_1_b": _bias_col(c1_b, out_c),
        # front kernel (spade_0 [+ spade_cut] + conv_0 [+ conv_cut])
        "sb0_w": jnp.concatenate([_flatten_w(sc0_w), _flatten_w(bi0_w)], axis=0),
        "sb0_b": jnp.concatenate([_bias_col(sc0_b, in_c),
                                  _bias_col(bi0_b, in_c)], axis=0),
        "conv_0_w": _flatten_w(c0_w), "conv_0_b": _bias_col(c0_b, mid_c),
    }
    sh_w = _flatten_w(sh0_w, seg_c_pad)
    sh_b = _bias_col(sh0_b, hid)
    if is_shortcut:
        shc_w, shc_b = _conv_pt(ks[8], seg_c, hid)        # spade_cut.shared
        scc_w, scc_b = _conv_pt(ks[9], hid, in_c)         # spade_cut.scale
        bic_w, bic_b = _conv_pt(ks[10], hid, in_c)        # spade_cut.bias
        cc_w, _ = _conv_pt(ks[11], in_c, out_c, bias=False)   # conv_cut (no bias)
        params["front_sh_w"] = jnp.concatenate(
            [sh_w, _flatten_w(shc_w, seg_c_pad)], axis=0)
        params["front_sh_b"] = jnp.concatenate([sh_b, _bias_col(shc_b, hid)], axis=0)
        params["sbc_w"] = jnp.concatenate([_flatten_w(scc_w), _flatten_w(bic_w)], axis=0)
        params["sbc_b"] = jnp.concatenate([_bias_col(scc_b, in_c),
                                           _bias_col(bic_b, in_c)], axis=0)
        params["conv_cut_w"] = _flatten_w(cc_w)
    else:
        params["front_sh_w"] = sh_w
        params["front_sh_b"] = sh_b
    return params


# --------------------------------------------------------------------------
# Pure-JAX reference (same bf16 weights / intermediates / f32 accumulation)
# --------------------------------------------------------------------------
def _ref_conv3x3(x, wflat, b):
    N, cin, H, W = x.shape
    cout = wflat.shape[0]
    xp = jnp.pad(x, ((0, 0), (0, 0), (1, 1), (1, 1)))
    out = jnp.zeros((N, cout, H, W), jnp.float32)
    for kh in range(3):
        for kw in range(3):
            t = kh * 3 + kw
            patch = xp[:, :, kh:kh + H, kw:kw + W].astype(jnp.bfloat16)
            out = out + jnp.einsum("nchw,oc->nohw", patch,
                                   wflat[:, t * cin:(t + 1) * cin],
                                   preferred_element_type=jnp.float32)
    if b is not None:
        out = out + b.reshape(1, cout, 1, 1)
    return out


def _ref_resblk(x, seg, params):
    H, W = x.shape[2:]
    in_c, mid_c, out_c, hid = (params["in_c"], params["mid_c"],
                               params["out_c"], params["hid"])
    seg_r = _pad_channels(_nearest_resize_nchw(seg, (H, W)), params["seg_c_pad"])

    mean_x = jnp.mean(x, axis=(0, 2, 3), keepdims=True)
    var_x = jnp.mean(x * x, axis=(0, 2, 3), keepdims=True) - mean_x * mean_x
    norm_x = (x - mean_x) * jax.lax.rsqrt(jnp.maximum(var_x, 0.0) + EPS)

    h_all = jnp.maximum(_ref_conv3x3(seg_r, params["front_sh_w"],
                                     params["front_sh_b"]), 0.0)
    sb0 = _ref_conv3x3(h_all[:, :hid], params["sb0_w"], params["sb0_b"])
    y0 = norm_x * (1.0 + sb0[:, :in_c]) + sb0[:, in_c:]
    y0 = jnp.where(y0 >= 0.0, y0, LEAKY_SLOPE * y0)
    z0 = _ref_conv3x3(y0, params["conv_0_w"], params["conv_0_b"])

    mean_z = jnp.mean(z0, axis=(0, 2, 3), keepdims=True)
    var_z = jnp.mean(z0 * z0, axis=(0, 2, 3), keepdims=True) - mean_z * mean_z
    z0b = z0.astype(jnp.bfloat16).astype(jnp.float32)      # bf16 HBM round trip
    norm_z = (z0b - mean_z) * jax.lax.rsqrt(jnp.maximum(var_z, 0.0) + EPS)

    h1 = jnp.maximum(_ref_conv3x3(seg_r, params["sh1_w"], params["sh1_b"]), 0.0)
    sb1 = _ref_conv3x3(h1, params["sb1_w"], params["sb1_b"])
    y1 = norm_z * (1.0 + sb1[:, :mid_c]) + sb1[:, mid_c:]
    y1 = jnp.where(y1 >= 0.0, y1, LEAKY_SLOPE * y1)
    out = _ref_conv3x3(y1, params["conv_1_w"], params["conv_1_b"])

    if params["is_shortcut"]:
        sbc = _ref_conv3x3(h_all[:, hid:], params["sbc_w"], params["sbc_b"])
        yc = norm_x * (1.0 + sbc[:, :in_c]) + sbc[:, in_c:]
        xs = _ref_conv3x3(yc, params["conv_cut_w"], None)
        xs = xs.astype(jnp.bfloat16).astype(jnp.float32)   # bf16 HBM round trip
    else:
        xs = x
    return out + xs


# --------------------------------------------------------------------------
if __name__ == "__main__":
    N, in_c, out_c = 2, 4, 8          # in_c != out_c -> shortcut branch exercised
    seg_c, hid = 3, 32                # args.seg_c, args.spade_hiden_c
    H = W = 16
    seg_h = seg_w = 8                 # seg map at lower resolution -> nearest upsample

    key = jax.random.PRNGKey(0)
    kx, ks, kp = jax.random.split(key, 3)
    x = jax.random.normal(kx, (N, in_c, H, W), jnp.float32)           # NCHW (PyTorch)
    seg_map = jax.random.normal(ks, (N, seg_c, seg_h, seg_w), jnp.float32)
    params = init_params(kp, in_c, out_c, seg_c, hid)

    out = jax.block_until_ready(spade_resblk(x, seg_map, params))
    assert out.shape == (N, out_c, H, W), out.shape
    assert bool(jnp.all(jnp.isfinite(out)))

    ref = _ref_resblk(x, seg_map, params)
    assert bool(jnp.allclose(out, ref, atol=5e-2, rtol=5e-2)), \
        float(jnp.max(jnp.abs(out - ref)))

    # no-shortcut path (in_c == out_c): residual is x itself
    params2 = init_params(jax.random.PRNGKey(1), in_c, in_c, seg_c, hid)
    out2 = jax.block_until_ready(spade_resblk(x, seg_map, params2))
    ref2 = _ref_resblk(x, seg_map, params2)
    assert out2.shape == (N, in_c, H, W)
    assert bool(jnp.allclose(out2, ref2, atol=5e-2, rtol=5e-2)), \
        float(jnp.max(jnp.abs(out2 - ref2)))

    print("KERNEL_OK")
</pallas_src>

<mosaic_0001>
module attributes {stable_mosaic.version = 11 : i64} {
  func.func @_bn_stats_kernel(%arg0: i32, %arg1: memref<1x4x362xf32, #tpu.memory_space<vmem>>, %arg2: memref<4x1xf32, #tpu.memory_space<vmem>>, %arg3: memref<4x1xf32, #tpu.memory_space<vmem>>, %arg4: memref<4x1xf32, #tpu.memory_space<vmem>>, %arg5: memref<4x1xf32, #tpu.memory_space<vmem>>) attributes {dimension_semantics = [#tpu.dimension_semantics<arbitrary>], iteration_bounds = array<i64: 2>, scalar_prefetch = 0 : i64, scratch_operands = 2 : i64, tpu.core_type = #tpu.core_type<tc>, window_params = [{transform_indices = @transform_0, window_bounds = array<i64: 1, 4, 362>}, {pipeline_mode = #tpu.pipeline_mode<synchronous>, transform_indices = @transform_1, window_bounds = array<i64: 4, 1>}, {pipeline_mode = #tpu.pipeline_mode<synchronous>, transform_indices = @transform_2, window_bounds = array<i64: 4, 1>}]} {
    %c0_i32 = arith.constant 0 : i32
    %0 = arith.cmpi eq, %arg0, %c0_i32 : i32
    %1 = arith.extui %0 : i1 to i32
    %c0_i32_0 = arith.constant 0 : i32
    %2 = arith.cmpi ne, %1, %c0_i32_0 : i32
    scf.if %2 {
      %cst_13 = arith.constant 0.000000e+00 : f32
      %19 = vector.broadcast %cst_13 : f32 to vector<4x1xf32>
      %c0_14 = arith.constant 0 : index
      %c0_15 = arith.constant 0 : index
      %20 = vector.load %arg4[%c0_14, %c0_15] : memref<4x1xf32, #tpu.memory_space<vmem>>, vector<4x1xf32>
      tpu.vector_store %arg4[%c0_14, %c0_15], %19 {strides = array<i32>} : memref<4x1xf32, #tpu.memory_space<vmem>>, vector<4x1xf32>,
      %cst_16 = arith.constant 0.000000e+00 : f32
      %21 = vector.broadcast %cst_16 : f32 to vector<4x1xf32>
      %c0_17 = arith.constant 0 : index
      %c0_18 = arith.constant 0 : index
      %22 = vector.load %arg5[%c0_17, %c0_18] : memref<4x1xf32, #tpu.memory_space<vmem>>, vector<4x1xf32>
      tpu.vector_store %arg5[%c0_17, %c0_18], %21 {strides = array<i32>} : memref<4x1xf32, #tpu.memory_space<vmem>>, vector<4x1xf32>,
      %cst_19 = arith.constant 0.000000e+00 : f32
      %23 = vector.broadcast %cst_19 : f32 to vector<4x1xf32>
      %c0_20 = arith.constant 0 : index
      %c0_21 = arith.constant 0 : index
      %24 = vector.load %arg2[%c0_20, %c0_21] : memref<4x1xf32, #tpu.memory_space<vmem>>, vector<4x1xf32>
      tpu.vector_store %arg2[%c0_20, %c0_21], %23 {strides = array<i32>} : memref<4x1xf32, #tpu.memory_space<vmem>>, vector<4x1xf32>,
      %cst_22 = arith.constant 0.000000e+00 : f32
      %25 = vector.broadcast %cst_22 : f32 to vector<4x1xf32>
      %c0_23 = arith.constant 0 : index
      %c0_24 = arith.constant 0 : index
      %26 = vector.load %arg3[%c0_23, %c0_24] : memref<4x1xf32, #tpu.memory_space<vmem>>, vector<4x1xf32>
      tpu.vector_store %arg3[%c0_23, %c0_24], %25 {strides = array<i32>} : memref<4x1xf32, #tpu.memory_space<vmem>>, vector<4x1xf32>,
    } else {
    }
    %c0 = arith.constant 0 : index
    %c0_1 = arith.constant 0 : index
    %c0_2 = arith.constant 0 : index
    %3 = vector.load %arg1[%c0, %c0_1, %c0_2] : memref<1x4x362xf32, #tpu.memory_space<vmem>>, vector<1x4x362xf32>
    %4 = vector.shape_cast %3 : vector<1x4x362xf32> to vector<4x362xf32>
    %c0_3 = arith.constant 0 : index
    %c0_4 = arith.constant 0 : index
    %5 = vector.load %arg4[%c0_3, %c0_4] : memref<4x1xf32, #tpu.memory_space<vmem>>, vector<4x1xf32>
    %cst = arith.constant dense<0.000000e+00> : vector<4xf32>
    %6 = vector.multi_reduction <add>, %4, %cst [1] : vector<4x362xf32> to vector<4xf32>
    %7 = vector.shape_cast %6 : vector<4xf32> to vector<4x1xf32>
    %8 = arith.addf %5, %7 : vector<4x1xf32>
    %c0_5 = arith.constant 0 : index
    %c0_6 = arith.constant 0 : index
    %9 = vector.load %arg4[%c0_5, %c0_6] : memref<4x1xf32, #tpu.memory_space<vmem>>, vector<4x1xf32>
    tpu.vector_store %arg4[%c0_5, %c0_6], %8 {strides = array<i32>} : memref<4x1xf32, #tpu.memory_space<vmem>>, vector<4x1xf32>,
    %c0_7 = arith.constant 0 : index
    %c0_8 = arith.constant 0 : index
    %10 = vector.load %arg5[%c0_7, %c0_8] : memref<4x1xf32, #tpu.memory_space<vmem>>, vector<4x1xf32>
    %11 = arith.mulf %4, %4 : vector<4x362xf32>
    %cst_9 = arith.constant dense<0.000000e+00> : vector<4xf32>
    %12 = vector.multi_reduction <add>, %11, %cst_9 [1] : vector<4x362xf32> to vector<4xf32>
    %13 = vector.shape_cast %12 : vector<4xf32> to vector<4x1xf32>
    %14 = arith.addf %10, %13 : vector<4x1xf32>
    %c0_10 = arith.constant 0 : index
    %c0_11 = arith.constant 0 : index
    %15 = vector.load %arg5[%c0_10, %c0_11] : memref<4x1xf32, #tpu.memory_space<vmem>>, vector<4x1xf32>
    tpu.vector_store %arg5[%c0_10, %c0_11], %14 {strides = array<i32>} : memref<4x1xf32, #tpu.memory_space<vmem>>, vector<4x1xf32>,
    %c1_i32 = arith.constant 1 : i32
    %16 = arith.cmpi eq, %arg0, %c1_i32 : i32
    %17 = arith.extui %16 : i1 to i32
    %c0_i32_12 = arith.constant 0 : i32
    %18 = arith.cmpi ne, %17, %c0_i32_12 : i32
    scf.if %18 {
      %c0_13 = arith.constant 0 : index
      %c0_14 = arith.constant 0 : index
      %19 = vector.load %arg4[%c0_13, %c0_14] : memref<4x1xf32, #tpu.memory_space<vmem>>, vector<4x1xf32>
      %cst_15 = arith.constant 0.001953125 : f32
      %20 = vector.broadcast %cst_15 : f32 to vector<4x1xf32>
      %21 = arith.mulf %19, %20 : vector<4x1xf32>
      %c0_16 = arith.constant 0 : index
      %c0_17 = arith.constant 0 : index
      %22 = vector.load %arg5[%c0_16, %c0_17] : memref<4x1xf32, #tpu.memory_space<vmem>>, vector<4x1xf32>
      %cst_18 = arith.constant 0.001953125 : f32
      %23 = vector.broadcast %cst_18 : f32 to vector<4x1xf32>
      %24 = arith.mulf %22, %23 : vector<4x1xf32>
      %25 = arith.mulf %21, %21 : vector<4x1xf32>
      %26 = arith.subf %24, %25 : vector<4x1xf32>
      %c0_19 = arith.constant 0 : index
      %c0_20 = arith.constant 0 : index
      %27 = vector.load %arg2[%c0_19, %c0_20] : memref<4x1xf32, #tpu.memory_space<vmem>>, vector<4x1xf32>
      tpu.vector_store %arg2[%c0_19, %c0_20], %21 {strides = array<i32>} : memref<4x1xf32, #tpu.memory_space<vmem>>, vector<4x1xf32>,
      %cst_21 = arith.constant 0.000000e+00 : f32
      %28 = vector.broadcast %cst_21 : f32 to vector<4x1xf32>
      %29 = arith.maximumf %26, %28 : vector<4x1xf32>
      %cst_22 = arith.constant 9.99999974E-6 : f32
      %30 = vector.broadcast %cst_22 : f32 to vector<4x1xf32>
      %31 = arith.addf %29, %30 : vector<4x1xf32>
      %32 = math.rsqrt %31 : vector<4x1xf32>
      %c0_23 = arith.constant 0 : index
      %c0_24 = arith.constant 0 : index
      %33 = vector.load %arg3[%c0_23, %c0_24] : memref<4x1xf32, #tpu.memory_space<vmem>>, vector<4x1xf32>
      tpu.vector_store %arg3[%c0_23, %c0_24], %32 {strides = array<i32>} : memref<4x1xf32, #tpu.memory_space<vmem>>, vector<4x1xf32>,
    } else {
    }
    return
  }
  func.func @transform_0(%arg0: i32) -> (i32, i32, i32) {
    %c0_i32 = arith.constant 0 : i32
    %c0_i32_0 = arith.constant 0 : i32
    %c0_i32_1 = arith.constant 0 : i32
    return %arg0, %c0_i32, %c0_i32_0 : i32, i32, i32
  }
  func.func @transform_1(%arg0: i32) -> (i32, i32) {
    %c0_i32 = arith.constant 0 : i32
    %c0_i32_0 = arith.constant 0 : i32
    %c0_i32_1 = arith.constant 0 : i32
    return %c0_i32, %c0_i32_0 : i32, i32
  }
  func.func @transform_2(%arg0: i32) -> (i32, i32) {
    %c0_i32 = arith.constant 0 : i32
    %c0_i32_0 = arith.constant 0 : i32
    %c0_i32_1 = arith.constant 0 : i32
    return %c0_i32, %c0_i32_0 : i32, i32
  }
}

</mosaic_0001>

<llo_original>
// kernel: tpu_custom_call.1
$region0: #{tpu_custom_call.1}
  #allocation0 [shape = 'u32[]', space=smem, size = 0x4, offset = 0x4, fixed_abs, tag = 'smem constant byte address 0x4 - core index']
  #allocation1 [shape = 'u32[144,128]{1,0:T(1,128)}', space=vmem, size = 0x12000, scoped, tag = 'internal scratch']
  #allocation2 [shape = 'f32[4,1]{1,0:T(4,128)}', space=vmem, size = 0x800, scoped, tag = 'scratch operand']
  #allocation3 [shape = 'f32[4,1]{1,0:T(4,128)}', space=vmem, size = 0x800, scoped, tag = 'scratch operand']
  %s0 = inlined_call_operand.hbm [shape: f32[2,4,362], index: 0, kind: input, shape index: {}]
  %s1 = inlined_call_operand.vmem [shape: f32[4,1], index: 1, kind: output, shape index: {0}]
  %s2 = inlined_call_operand.vmem [shape: f32[4,1], index: 2, kind: output, shape index: {1}]
  %3 = xla_tuple %s1, %s2
  %s4 = sld [smem:[#allocation0]]
  $region57: #{tpu_custom_call.1} parent=0
    _
  %s6 = ssub.s32 1, %s4
  %s7 = scalar_select 0, %s6, %s4
  $region1: #{tpu_custom_call.1} parent=0
    #allocation4 [shape = 'u8[12288]{0}', space=vmem, size = 0x3000, scoped, tag = 'input window, operand 0']
    #allocation5 [shape = 's32[2]{0}', space=sflag, size = 0x8, scoped, tag = 'scoped memory for tpu_custom_call.1']
    %8 = vsyncpa [#allocation5], 0
    %s9 = scalar_lea.sflag [#allocation5], 1
    %10 = vsyncpa %s9, 0
    loop: start=0, step=1, limit=4
    $region2: #{tpu_custom_call.1} parent=1 // loop_pre_header
      _
    $region3: #{tpu_custom_call.1} parent=1 // loop_header
      %s12 = sphi 0, %s16
      %p13 = scmp.ge.s32.totalorder %s12, 4
      %s22 = sphi 0, %s24
      %s25 = sphi 0, %s22
      %s26 = sphi 0, %s25
      %s42 = sphi 0, %s26
      %s46 = sphi 0, %s46
      %s48 = sphi 0, %s46
      %s49 = sphi 0, %s48
      %s63 = sphi 0, %s49
      %s67 = sphi 0, %s67
      %s69 = sphi 0, %s67
      %s70 = sphi 0, %s69
      %s84 = sphi 0, %s70
    $region4: #{tpu_custom_call.1} parent=1 // loop_header_branch
      %15 = sbr.rel (%p13) target = $region8
    $region5: #{tpu_custom_call.1} parent=1 // loop_body
      %s17 = ssub.s32 %s12, 1
      %s18 = ssub.s32 %s12, 2
      %s19 = sadd.s32 %s12, 1
      %s20 = ssub.s32 %s12, %s19
      %p21 = scmp.eq.s32.totalorder %s20, 0
      %s23 = sadd.s32 %s22, 1
      %s24 = scalar_select %p21, %s22, %s23
      %p27 = pneg %p21
      %p28 = scmp.eq.s32.totalorder %s12, 1
      %p29 = por %p27, %p28
      %p30 = scmp.ne.s32.totalorder %s22, %s25
      %p31 = scmp.eq.s32.totalorder %s12, 0
      %p32 = por %p30, %p31
      %p33 = scmp.ne.s32.totalorder %s22, %s25
      %p34 = scmp.eq.s32.totalorder %s17, 1
      %p35 = por %p33, %p34
      %p36 = scmp.ne.s32.totalorder %s25, %s26
      %p37 = scmp.eq.s32.totalorder %s17, 0
      %p38 = por %p36, %p37
      %p39 = scmp.ne.s32.totalorder %s25, %s26
      %p40 = scmp.eq.s32.totalorder %s18, 1
      %p41 = por %p39, %p40
      %p43 = scmp.ne.s32.totalorder %s26, %s42
      %p44 = scmp.eq.s32.totalorder %s18, 0
      %p45 = por %p43, %p44
      %s47 = sadd.s32 %s46, 1
      %p50 = scmp.eq.s32.totalorder %s12, 1
      %p51 = scmp.ne.s32.totalorder %s46, %s48
      %p52 = scmp.eq.s32.totalorder %s12, 0
      %p53 = por %p51, %p52
      %p54 = scmp.ne.s32.totalorder %s46, %s48
      %p55 = scmp.eq.s32.totalorder %s17, 1
      %p56 = por %p54, %p55
      %p57 = scmp.ne.s32.totalorder %s48, %s49
      %p58 = scmp.eq.s32.totalorder %s17, 0
      %p59 = por %p57, %p58
      %p60 = scmp.ne.s32.totalorder %s48, %s49
      %p61 = scmp.eq.s32.totalorder %s18, 1
      %p62 = por %p60, %p61
      %p64 = scmp.ne.s32.totalorder %s49, %s63
      %p65 = scmp.eq.s32.totalorder %s18, 0
      %p66 = por %p64, %p65
      %s68 = sadd.s32 %s67, 1
      %p71 = scmp.eq.s32.totalorder %s12, 1
      %p72 = scmp.ne.s32.totalorder %s67, %s69
      %p73 = scmp.eq.s32.totalorder %s12, 0
      %p74 = por %p72, %p73
      %p75 = scmp.ne.s32.totalorder %s67, %s69
      %p76 = scmp.eq.s32.totalorder %s17, 1
      %p77 = por %p75, %p76
      %p78 = scmp.ne.s32.totalorder %s69, %s70
      %p79 = scmp.eq.s32.totalorder %s17, 0
      %p80 = por %p78, %p79
      %p81 = scmp.ne.s32.totalorder %s69, %s70
      %p82 = scmp.eq.s32.totalorder %s18, 1
      %p83 = por %p81, %p82
      %p85 = scmp.ne.s32.totalorder %s70, %s84
      %p86 = scmp.eq.s32.totalorder %s18, 0
      %p87 = por %p85, %p86
      %p88 = scmp.le.s32.totalorder 1, %s12
      %p89 = scmp.lt.s32.totalorder %s12, 3
      %p90 = pnand %p88, %p89
      %p91 = pneg %p90
      // Predicated region
      $region9: #{tpu_custom_call.1} parent=5 // pred_check
        _
      $region10: #{tpu_custom_call.1} parent=5 // pred_check_branch
        %93 = sbr.rel (%p90) target = $region12
      $region11: #{tpu_custom_call.1} parent=5 // pred_region
        %s94 = ssub.s32 %s12, 1
      $region12: #{tpu_custom_call.1} parent=5 // pred_fallthru
        _
      %p95 = scmp.lt.s32.totalorder %s12, 2
      // Predicated region
      $region13: #{tpu_custom_call.1} parent=5 // pred_check
        %p96 = pneg %p95
      $region14: #{tpu_custom_call.1} parent=5 // pred_check_branch
        %98 = sbr.rel (%p96) target = $region16
      $region15: #{tpu_custom_call.1} parent=5 // pred_region
        // Predicated region
        $region17: #{tpu_custom_call.1} parent=15 // pred_check
          %p99 = pneg %p32
        $region18: #{tpu_custom_call.1} parent=15 // pred_check_branch
          %101 = sbr.rel (%p99) target = $region20
        $region19: #{tpu_custom_call.1} parent=15 // pred_region
          %s102 = sand.u32 %s22, 1
          %s103 = scalar_lea.sflag [#allocation5], %s102
          %s104 = sand.u32 %s22, 1
          %s105 = smul.addr %s104, 12
          %s106 = scalar_lea.vmem [#allocation4], %s105
          %s108 = ssub.s32 192, 192
          %109 = vsyncadd %s103, %s108
          %s110 = smul.addr %s12, 3
          %s111 = smul.addr %s110, 64
          %s112 = scalar_lea.hbm %s0, %s111
          %s114 = sshll.u32 %s106, 4
          %s115 = int_to_ptr.vmem [resolvable:$true] %s114
          %117 = dma.hbm_to_vmem [thread:$0]  %s112, 192, %s115, %s103
        $region20: #{tpu_custom_call.1} parent=15 // pred_fallthru
          _
      $region16: #{tpu_custom_call.1} parent=5 // pred_fallthru
        _
      %p118 = scmp.le.s32.totalorder 1, %s12
      %p119 = scmp.lt.s32.totalorder %s12, 3
      %p120 = pnand %p118, %p119
      %p121 = pneg %p120
      // Predicated region
      $region21: #{tpu_custom_call.1} parent=5 // pred_check
        _
      $region22: #{tpu_custom_call.1} parent=5 // pred_check_branch
        %123 = sbr.rel (%p120) target = $region24
      $region23: #{tpu_custom_call.1} parent=5 // pred_region
        %s124 = ssub.s32 %s12, 1
        %s125 = sand.u32 %s25, 1
        %s126 = scalar_lea.sflag [#allocation5], %s125
        %s127 = sand.u32 %s25, 1
        %s128 = smul.addr %s127, 12
        %s129 = scalar_lea.vmem [#allocation4], %s128
        // Predicated region
        $region25: #{tpu_custom_call.1} parent=23 // pred_check
          %p130 = pneg %p38
        $region26: #{tpu_custom_call.1} parent=23 // pred_check_branch
          %132 = sbr.rel (%p130) target = $region28
        $region27: #{tpu_custom_call.1} parent=23 // pred_region
          %133 = dma.done %s126, 192
        $region28: #{tpu_custom_call.1} parent=23 // pred_fallthru
          _
        %s134 = sand.u32 %s25, 1
        %s135 = scalar_lea.sflag [#allocation5], %s134
        %s136 = sand.u32 %s25, 1
        %s137 = smul.addr %s136, 12
        %s138 = scalar_lea.vmem [#allocation4], %s137
        %p139 = pneg %p38
        %p140 = pneg %p35
        %p141 = pneg %p59
        %p142 = pneg %p56
        %p143 = pneg %p80
        %p144 = pneg %p77
        %p145 = scmp.eq.s32.totalorder %s17, 0
        // Predicated region
        $region29: #{tpu_custom_call.1} parent=23 // pred_check
          %p146 = pneg %p145
        $region30: #{tpu_custom_call.1} parent=23 // pred_check_branch
          %148 = sbr.rel (%p146) target = $region32
        $region31: #{tpu_custom_call.1} parent=23 // pred_region
          %vm149 = vcmask 3072
          %150 = vst.msk [vmem:[#allocation2] sm:$0xf] %vm149, 0.0
          %151 = vst.msk [vmem:[#allocation3] sm:$0xf] %vm149, 0.0
          %152 = vst.msk [vmem:[%s1] sm:$0xf] %vm149, 0.0
          %153 = vst.msk [vmem:[%s2] sm:$0xf] %vm149, 0.0
        $region32: #{tpu_custom_call.1} parent=23 // pred_fallthru
          _
        %v154 = vld [vmem:[%s129] sm:$0xff]
        %v155 = vld [vmem:[%s129 + $0x8] sm:$0xf]
        %v156 = vld [vmem:[#allocation2] sm:$0xf]
        %v158 = vcombine.high %v154, %v154
        %vm160 = vcmask 1043456
        %v161 = vsel %vm160, %v154, 0.0
        %v162 = vsel %vm160, %v158, 0.0
        %v163 = vadd.f32 %v161, %v162
        %vm164 = vcmask 863232
        %v165 = vsel %vm164, %v155, 0.0
        %v166 = vadd.f32 %v163, %v165
        %167 = vadd.xlane.f32.xlu0 %v166
        %v168 = vpop.xlane.xlu0 %167
        %v169 = vadd.f32 %v156, %v168
        %vm170 = vcmask 3072
        %171 = vst.msk [vmem:[#allocation2] sm:$0xf] %vm170, %v169
        %v172 = vld [vmem:[#allocation3] sm:$0xf]
        %v173 = vmul.f32 %v154, %v154
        %v174 = vmul.f32 %v155, %v155
        %v176 = vcombine.high %v173, %v173
        %v178 = vsel %vm160, %v173, 0.0
        %v179 = vsel %vm160, %v176, 0.0
        %v180 = vadd.f32 %v178, %v179
        %v181 = vsel %vm164, %v174, 0.0
        %v182 = vadd.f32 %v180, %v181
        %183 = vadd.xlane.f32.xlu0 %v182
        %v184 = vpop.xlane.xlu0 %183
        %v185 = vadd.f32 %v172, %v184
        %186 = vst.msk [vmem:[#allocation3] sm:$0xf] %vm170, %v185
        %p187 = scmp.eq.s32.totalorder %s17, 1
        // Predicated region
        $region33: #{tpu_custom_call.1} parent=23 // pred_check
          %p188 = pneg %p187
        $region34: #{tpu_custom_call.1} parent=23 // pred_check_branch
          %190 = sbr.rel (%p188) target = $region36
        $region35: #{tpu_custom_call.1} parent=23 // pred_region
          %v191 = vld [vmem:[#allocation2] sm:$0xf]
          %v192 = vmul.f32 %v191, 0.001953125
          %v193 = vld [vmem:[#allocation3] sm:$0xf]
          %v194 = vmul.f32 %v193, 0.001953125
          %v195 = vmul.f32 %v192, %v192
          %v196 = vsub.f32 %v194, %v195
          %197 = vst.msk [vmem:[%s1] sm:$0xf] %vm170, %v192
          %v198 = vmax.f32 %v196, 0.0
          %v199 = vadd.f32 %v198, 1e-05
          %v200 = vrsqrt.pop %v199
          %201 = vst.msk [vmem:[%s2] sm:$0xf] %vm170, %v200
        $region36: #{tpu_custom_call.1} parent=23 // pred_fallthru
          _
        // Predicated region
        $region37: #{tpu_custom_call.1} parent=23 // pred_check
          %p202 = pneg %p56
        $region38: #{tpu_custom_call.1} parent=23 // pred_check_branch
          %204 = sbr.rel (%p202) target = $region40
        $region39: #{tpu_custom_call.1} parent=23 // pred_region
          _
        $region40: #{tpu_custom_call.1} parent=23 // pred_fallthru
          _
        // Predicated region
        $region41: #{tpu_custom_call.1} parent=23 // pred_check
          %p205 = pneg %p77
        $region42: #{tpu_custom_call.1} parent=23 // pred_check_branch
          %207 = sbr.rel (%p205) target = $region44
        $region43: #{tpu_custom_call.1} parent=23 // pred_region
          _
        $region44: #{tpu_custom_call.1} parent=23 // pred_fallthru
          _
        // Predicated region
        $region45: #{tpu_custom_call.1} parent=23 // pred_check
          %p208 = pneg %p56
        $region46: #{tpu_custom_call.1} parent=23 // pred_check_branch
          %210 = sbr.rel (%p208) target = $region48
        $region47: #{tpu_custom_call.1} parent=23 // pred_region
          _
        $region48: #{tpu_custom_call.1} parent=23 // pred_fallthru
          _
        // Predicated region
        $region49: #{tpu_custom_call.1} parent=23 // pred_check
          %p211 = pneg %p77
        $region50: #{tpu_custom_call.1} parent=23 // pred_check_branch
          %213 = sbr.rel (%p211) target = $region52
        $region51: #{tpu_custom_call.1} parent=23 // pred_region
          _
        $region52: #{tpu_custom_call.1} parent=23 // pred_fallthru
          _
      $region24: #{tpu_custom_call.1} parent=5 // pred_fallthru
        _
      %p214 = scmp.le.s32.totalorder 2, %s12
      // Predicated region
      $region53: #{tpu_custom_call.1} parent=5 // pred_check
        %p215 = pneg %p214
      $region54: #{tpu_custom_call.1} parent=5 // pred_check_branch
        %217 = sbr.rel (%p215) target = $region56
      $region55: #{tpu_custom_call.1} parent=5 // pred_region
        %s218 = ssub.s32 %s12, 2
      $region56: #{tpu_custom_call.1} parent=5 // pred_fallthru
        _
    $region6: #{tpu_custom_call.1} parent=1 // loop_footer
      %s16 = sadd.s32 1, %s12
    $region7: #{tpu_custom_call.1} parent=1 // loop_footer_branch
      %11 = sbr.rel target = $region3
    $region8: #{tpu_custom_call.1} parent=1 // loop_exit
      _
    %219 = vsyncpa [#allocation5], 1
    %s220 = scalar_lea.sflag [#allocation5], 1
    %221 = vsyncpa %s220, 1

</llo_original>
